<compile_context>
chip_gen: v7x
topology: tpu7x:2x2x1
jax: 0.10.0
libtpu: 0.0.40
codegen_flags: <defaults>
</compile_context>

<pallas_src>
import math
import jax
import jax.numpy as jnp
from jax.experimental import pallas as pl
from jax.experimental.pallas import tpu as pltpu


def _round_up(x: int, m: int) -> int:
    return ((x + m - 1) // m) * m


def _cdiv(a: int, b: int) -> int:
    return (a + b - 1) // b


def _make_tau_kernel(tn: int, alpha: float, beta: float, epsilon: float,
                     min_denominator: float, approx_reciprocal: bool,
                     matmul_dtype):
    # risk >= 0, so if beta + epsilon already exceeds min_denominator the clamp
    # is mathematically dead -> drop it at trace time (one fewer VPU pass).
    clamp_is_dead = (beta + epsilon) > min_denominator

    def tau_kernel(x_ref, w_ref, b_ref, o_ref):
        x = x_ref[...]                                    # (bm, D_in) f32
        if matmul_dtype is not None:
            x = x.astype(matmul_dtype)                    # bf16 MXU path (opt-in)
        # One fused MXU matmul producing [prog_lin || risk_lin] for this column
        # block; f32 accumulate, bias added in f32.
        y = jnp.dot(x, w_ref[...], preferred_element_type=jnp.float32)
        y = y + b_ref[...]
        prog_lin = y[:, :tn]                              # 128-aligned lane slice
        risk_lin = y[:, tn:]

        progress = jnp.tanh(prog_lin)                     # EUP
        risk = jnp.maximum(risk_lin, 0.0)                 # VPU

        numerator = progress + alpha
        denominator = risk + (beta + epsilon)
        if not clamp_is_dead:
            denominator = jnp.maximum(denominator, min_denominator)

        if approx_reciprocal:
            # Approx reciprocal rides the EUP slot; the saturating outer tanh
            # attenuates its ~1e-4 relative error.
            tau = jnp.tanh(numerator * pl.reciprocal(denominator, approx=True))
        else:
            tau = jnp.tanh(numerator / denominator)

        o_ref[...] = tau.astype(o_ref.dtype)              # lane-dense full vst

    return tau_kernel


def fuse_tau_params(wp, bp, wr, br, *, col_block: int = 512, matmul_dtype=None):
    """Build the fused weight/bias ONCE (call at init time, not per forward).

    Layout: output columns are tiled into blocks of width tn (multiple of 128,
    <= col_block); the fused weight has, per block j, the contiguous slab
    [wp[:, blk_j] || wr[:, blk_j]] of width 2*tn, so each grid step DMAs one
    rectangular tile and the in-kernel prog/risk split is 128-aligned.
    """
    wp = jnp.asarray(wp, jnp.float32)
    wr = jnp.asarray(wr, jnp.float32)
    D_in, D_out = wp.shape

    tn = _round_up(min(col_block, _round_up(D_out, 128)), 128)
    D_out_p = _round_up(D_out, tn)
    nb = D_out_p // tn
    pad = D_out_p - D_out

    def pad_cols(a):
        return jnp.pad(a, ((0, 0), (0, pad)))

    wp_p = pad_cols(wp)
    wr_p = pad_cols(wr)
    bp_p = pad_cols(jnp.reshape(jnp.asarray(bp, jnp.float32), (1, D_out)))
    br_p = pad_cols(jnp.reshape(jnp.asarray(br, jnp.float32), (1, D_out)))

    w_fused = jnp.concatenate(
        [wp_p.reshape(D_in, nb, tn), wr_p.reshape(D_in, nb, tn)], axis=2
    ).reshape(D_in, nb * 2 * tn)
    b_fused = jnp.concatenate(
        [bp_p.reshape(1, nb, tn), br_p.reshape(1, nb, tn)], axis=2
    ).reshape(1, nb * 2 * tn)

    if matmul_dtype is not None:
        w_fused = w_fused.astype(matmul_dtype)

    return {
        "w_fused": w_fused,          # (D_in, nb * 2 * tn)
        "b_fused": b_fused,          # (1,    nb * 2 * tn), f32
        "d_in": D_in,
        "d_out": D_out,
        "tn": tn,
        "nb": nb,
        "matmul_dtype": matmul_dtype,
    }


def tau_r_layer(x, fused, *, alpha=0.1, beta=0.1, epsilon=1e-6,
                min_denominator=1e-5, block_b=512, approx_reciprocal=True):
    """TauRLayer forward with a single fused Pallas kernel.

    x     : (B, D_in) float32 (1-D input is treated as a single row)
    fused : output of fuse_tau_params()  (built once at init time)
    """
    x = jnp.asarray(x, jnp.float32)
    if x.ndim == 1:
        x = x[None, :]
    B, D_in = x.shape
    assert D_in == fused["d_in"], "input_dim mismatch"

    w_fused = fused["w_fused"]
    b_fused = fused["b_fused"]
    D_out = fused["d_out"]
    tn = fused["tn"]
    nb = fused["nb"]
    mm_dtype = fused["matmul_dtype"]
    D_out_p = nb * tn

    # Batch tile: no padding of x. Keep >= 2 grid steps when B > 8 so a v7x
    # megacore can shard the "parallel" batch axis; the ragged last block is
    # handled by Pallas (padded read, masked writeback).
    if B <= 8:
        bm = B                                   # single full-dim block
    else:
        bm = max(8, min(block_b, _round_up(_cdiv(B, 2), 8)))
    grid_b = _cdiv(B, bm)

    kernel = _make_tau_kernel(tn, alpha, beta, epsilon, min_denominator,
                              approx_reciprocal, mm_dtype)

    # VMEM budget from tile arithmetic (double buffers + f32 intermediate y),
    # clamped under v7x's 64 MiB physical VMEM; also lifts v5e's 16 MiB scoped
    # default when needed.
    w_item = jnp.dtype(w_fused.dtype).itemsize
    per_buf = (bm * D_in * 4            # x tile
               + D_in * 2 * tn * w_item  # fused weight tile
               + 2 * tn * 4              # bias tile
               + bm * tn * 4)            # out tile
    y_bytes = bm * 2 * tn * 4
    vmem_limit = min(max(2 * per_buf + 2 * y_bytes + (2 << 20), 8 << 20), 64 << 20)

    cost = pl.CostEstimate(
        flops=2 * B * D_in * 2 * D_out_p,
        transcendentals=3 * B * D_out_p,
        bytes_accessed=(B * D_in * 4 + w_fused.size * w_item
                        + b_fused.size * 4 + B * D_out_p * 4),
    )

    out = pl.pallas_call(
        kernel,
        out_shape=jax.ShapeDtypeStruct((B, D_out_p), jnp.float32),
        grid_spec=pl.GridSpec(
            grid=(grid_b, nb),
            in_specs=[
                pl.BlockSpec((bm, D_in), lambda i, j: (i, 0)),      # x tile
                pl.BlockSpec((D_in, 2 * tn), lambda i, j: (0, j)),  # fused W tile
                pl.BlockSpec((1, 2 * tn), lambda i, j: (0, j)),     # fused bias tile
            ],
            out_specs=pl.BlockSpec((bm, tn), lambda i, j: (i, j)),
        ),
        compiler_params=pltpu.CompilerParams(
            dimension_semantics=("parallel", "parallel"),
            vmem_limit_bytes=vmem_limit),
        cost_estimate=cost,
    )(x, w_fused, b_fused)

    # Slice only when lane padding was actually added (no-op otherwise).
    if D_out_p != D_out:
        out = out[:, :D_out]
    return out


def init_tau_params(key, input_dim, output_dim, gain=0.1):
    """xavier_uniform_(gain) weights + zero biases, like the torch module."""
    bound = gain * math.sqrt(6.0 / (input_dim + output_dim))
    k1, k2 = jax.random.split(key)
    # torch Linear weight is (out, in); store transposed as (in, out) for x @ W.
    wp = jax.random.uniform(k1, (input_dim, output_dim), jnp.float32, -bound, bound)
    wr = jax.random.uniform(k2, (input_dim, output_dim), jnp.float32, -bound, bound)
    bp = jnp.zeros((1, output_dim), jnp.float32)
    br = jnp.zeros((1, output_dim), jnp.float32)
    return wp, bp, wr, br


def tau_r_layer_ref(x, wp, bp, wr, br, *, alpha=0.1, beta=0.1,
                    epsilon=1e-6, min_denominator=1e-5):
    """Pure-JAX reference of the same math for correctness checks."""
    progress = jnp.tanh(x @ wp + bp)
    risk = jax.nn.relu(x @ wr + br)
    numerator = progress + alpha
    denominator = jnp.maximum(risk + beta + epsilon, min_denominator)
    return jnp.clip(jnp.tanh(numerator / denominator), -10.0, 10.0)


if __name__ == "__main__":
    key = jax.random.PRNGKey(0)
    kx, kp = jax.random.split(key)

    B, D_in, D_out = 8, 32, 32
    x = jax.random.normal(kx, (B, D_in), jnp.float32)
    wp, bp, wr, br = init_tau_params(kp, D_in, D_out)

    # Build fused/padded params once (init-time cost, not per forward).
    fused = fuse_tau_params(wp, bp, wr, br)

    # Fast path: approx reciprocal on the EUP.
    out = tau_r_layer(x, fused, approx_reciprocal=True)
    out = jax.block_until_ready(out)

    ref = tau_r_layer_ref(x, wp, bp, wr, br)
    assert out.shape == (B, D_out)
    assert jnp.allclose(out, ref, atol=2e-3, rtol=2e-3), "mismatch vs reference (approx)"

    # Exact-reciprocal validation path (numerics check against the reference).
    out_exact = jax.block_until_ready(tau_r_layer(x, fused, approx_reciprocal=False))
    assert jnp.allclose(out_exact, ref, atol=1e-5, rtol=1e-5), "mismatch vs reference (exact)"

    print("KERNEL_OK")
</pallas_src>

<mosaic_0001>
module attributes {stable_mosaic.version = 11 : i64} {
  func.func @tau_kernel(%arg0: i32, %arg1: i32, %arg2: memref<8x32xf32, #tpu.memory_space<vmem>>, %arg3: memref<32x256xf32, #tpu.memory_space<vmem>>, %arg4: memref<1x256xf32, #tpu.memory_space<vmem>>, %arg5: memref<8x128xf32, #tpu.memory_space<vmem>>) attributes {dimension_semantics = [#tpu.dimension_semantics<parallel>, #tpu.dimension_semantics<parallel>], iteration_bounds = array<i64: 1, 1>, scalar_prefetch = 0 : i64, scratch_operands = 0 : i64, tpu.core_type = #tpu.core_type<tc>, window_params = [{transform_indices = @transform_0, window_bounds = array<i64: 8, 32>}, {transform_indices = @transform_1, window_bounds = array<i64: 32, 256>}, {transform_indices = @transform_2, window_bounds = array<i64: 1, 256>}, {transform_indices = @transform_3, window_bounds = array<i64: 8, 128>}]} {
    %c0 = arith.constant 0 : index
    %c0_0 = arith.constant 0 : index
    %0 = vector.load %arg2[%c0, %c0_0] : memref<8x32xf32, #tpu.memory_space<vmem>>, vector<8x32xf32>
    %c0_1 = arith.constant 0 : index
    %c0_2 = arith.constant 0 : index
    %1 = vector.load %arg3[%c0_1, %c0_2] : memref<32x256xf32, #tpu.memory_space<vmem>>, vector<32x256xf32>
    %cst = arith.constant dense<0.000000e+00> : vector<8x256xf32>
    %2 = tpu.matmul %0, %1, %cst {dimension_numbers = #tpu.dot_dimension_numbers<[1], [0], [0], [1], [0, 0, 1, 1], [], []>} : vector<8x32xf32>, vector<32x256xf32>, vector<8x256xf32> -> vector<8x256xf32>
    %c0_3 = arith.constant 0 : index
    %c0_4 = arith.constant 0 : index
    %3 = vector.load %arg4[%c0_3, %c0_4] : memref<1x256xf32, #tpu.memory_space<vmem>>, vector<1x256xf32>
    %4 = vector.broadcast %3 : vector<1x256xf32> to vector<8x256xf32>
    %5 = arith.addf %2, %4 : vector<8x256xf32>
    %6 = vector.extract_strided_slice %5 {offsets = [0, 0], sizes = [8, 128], strides = [1, 1]} : vector<8x256xf32> to vector<8x128xf32>
    %7 = vector.extract_strided_slice %5 {offsets = [0, 128], sizes = [8, 128], strides = [1, 1]} : vector<8x256xf32> to vector<8x128xf32>
    %8 = math.tanh %6 : vector<8x128xf32>
    %cst_5 = arith.constant 0.000000e+00 : f32
    %9 = vector.broadcast %cst_5 : f32 to vector<8x128xf32>
    %10 = arith.maximumf %7, %9 : vector<8x128xf32>
    %cst_6 = arith.constant 1.000000e-01 : f32
    %11 = vector.broadcast %cst_6 : f32 to vector<8x128xf32>
    %12 = arith.addf %8, %11 : vector<8x128xf32>
    %cst_7 = arith.constant 1.000010e-01 : f32
    %13 = vector.broadcast %cst_7 : f32 to vector<8x128xf32>
    %14 = arith.addf %10, %13 : vector<8x128xf32>
    %15 = tpu.reciprocal %14 {approx = true} : vector<8x128xf32> -> vector<8x128xf32>
    %16 = arith.mulf %12, %15 : vector<8x128xf32>
    %17 = math.tanh %16 : vector<8x128xf32>
    %c0_8 = arith.constant 0 : index
    %c0_9 = arith.constant 0 : index
    %18 = vector.load %arg5[%c0_8, %c0_9] : memref<8x128xf32, #tpu.memory_space<vmem>>, vector<8x128xf32>
    tpu.vector_store %arg5[%c0_8, %c0_9], %17 {strides = array<i32>} : memref<8x128xf32, #tpu.memory_space<vmem>>, vector<8x128xf32>,
    return
  }
  func.func @transform_0(%arg0: i32, %arg1: i32) -> (i32, i32) {
    %c0_i32 = arith.constant 0 : i32
    %c0_i32_0 = arith.constant 0 : i32
    return %arg0, %c0_i32 : i32, i32
  }
  func.func @transform_1(%arg0: i32, %arg1: i32) -> (i32, i32) {
    %c0_i32 = arith.constant 0 : i32
    %c0_i32_0 = arith.constant 0 : i32
    return %c0_i32, %arg1 : i32, i32
  }
  func.func @transform_2(%arg0: i32, %arg1: i32) -> (i32, i32) {
    %c0_i32 = arith.constant 0 : i32
    %c0_i32_0 = arith.constant 0 : i32
    return %c0_i32, %arg1 : i32, i32
  }
  func.func @transform_3(%arg0: i32, %arg1: i32) -> (i32, i32) {
    %c0_i32 = arith.constant 0 : i32
    return %arg0, %arg1 : i32, i32
  }
}

</mosaic_0001>

<llo_original>
// kernel: tpu_custom_call.1
$region0: #{tpu_custom_call.1}
  #allocation0 [shape = 'u32[]', space=smem, size = 0x4, offset = 0x4, fixed_abs, tag = 'smem constant byte address 0x4 - core index']
  #allocation1 [shape = 'u32[144,128]{1,0:T(1,128)}', space=vmem, size = 0x12000, scoped, tag = 'internal scratch']
  %s0 = inlined_call_operand.hbm [shape: f32[8,32], index: 0, kind: input, shape index: {}]
  %s1 = inlined_call_operand.hbm [shape: f32[32,256], index: 1, kind: input, shape index: {}]
  %s2 = inlined_call_operand.vmem [shape: f32[1,256], index: 2, kind: input, shape index: {}]
  %s3 = inlined_call_operand.hbm [shape: f32[8,128], index: 3, kind: output, shape index: {}]
  %s4 = sld [smem:[#allocation0]]
  $region30: #{tpu_custom_call.1} parent=0
    _
  %s6 = ssub.s32 1, %s4
  %s7 = scalar_select 0, %s6, %s4
  $region1: #{tpu_custom_call.1} parent=0
    #allocation2 [shape = 'u8[4096]{0}', space=vmem, size = 0x1000, scoped, tag = 'input window, operand 0, single buffered']
    #allocation3 [shape = 's32[1]{0}', space=sflag, size = 0x4, scoped, tag = 'scoped memory for tpu_custom_call.1']
    #allocation4 [shape = 's32[1]{0}', space=sflag, size = 0x4, scoped, tag = 'scoped memory for tpu_custom_call.1']
    #allocation5 [shape = 'u8[32768]{0}', space=vmem, size = 0x8000, scoped, tag = 'input window, operand 1, single buffered']
    #allocation6 [shape = 's32[1]{0}', space=sflag, size = 0x4, scoped, tag = 'scoped memory for tpu_custom_call.1']
    #allocation7 [shape = 'u8[4096]{0}', space=vmem, size = 0x1000, scoped, tag = 'output window, operand 0, single buffered']
    %8 = vsyncpa [#allocation3], 0
    %9 = vsyncpa [#allocation6], 0
    %10 = vsyncpa [#allocation4], 0
    // Predicated region
    $region2: #{tpu_custom_call.1} parent=1 // pred_check
      _
    $region3: #{tpu_custom_call.1} parent=1 // pred_check_branch
      %12 = sbr.rel (0) target = $region5
    $region4: #{tpu_custom_call.1} parent=1 // pred_region
      %s14 = ssub.s32 128, 128
      %15 = vsyncadd [#allocation3], %s14
      %s17 = sshll.u32 [#allocation2], 4
      %s18 = int_to_ptr.vmem [resolvable:$true] %s17
      %20 = dma.hbm_to_vmem [thread:$0]  %s0, 128, %s18, [#allocation3]
    $region5: #{tpu_custom_call.1} parent=1 // pred_fallthru
      _
    // Predicated region
    $region6: #{tpu_custom_call.1} parent=1 // pred_check
      _
    $region7: #{tpu_custom_call.1} parent=1 // pred_check_branch
      %22 = sbr.rel (0) target = $region9
    $region8: #{tpu_custom_call.1} parent=1 // pred_region
      %s24 = ssub.s32 1024, 1024
      %25 = vsyncadd [#allocation6], %s24
      %s26 = sshll.u32 [#allocation5], 4
      %s27 = int_to_ptr.vmem [resolvable:$true] %s26
      %32 = dma.hbm_to_vmem [thread:$0]  %s1, 1024, %s27, [#allocation6], 256, 256, 16
    $region9: #{tpu_custom_call.1} parent=1 // pred_fallthru
      _
    // Predicated region
    $region10: #{tpu_custom_call.1} parent=1 // pred_check
      _
    $region11: #{tpu_custom_call.1} parent=1 // pred_check_branch
      %34 = sbr.rel (0) target = $region13
    $region12: #{tpu_custom_call.1} parent=1 // pred_region
      _
    $region13: #{tpu_custom_call.1} parent=1 // pred_fallthru
      _
    // Predicated region
    $region14: #{tpu_custom_call.1} parent=1 // pred_check
      _
    $region15: #{tpu_custom_call.1} parent=1 // pred_check_branch
      %36 = sbr.rel (0) target = $region17
    $region16: #{tpu_custom_call.1} parent=1 // pred_region
      %37 = dma.done [#allocation3], 128
    $region17: #{tpu_custom_call.1} parent=1 // pred_fallthru
      _
    // Predicated region
    $region18: #{tpu_custom_call.1} parent=1 // pred_check
      _
    $region19: #{tpu_custom_call.1} parent=1 // pred_check_branch
      %39 = sbr.rel (0) target = $region21
    $region20: #{tpu_custom_call.1} parent=1 // pred_region
      %40 = dma.done [#allocation6], 1024
    $region21: #{tpu_custom_call.1} parent=1 // pred_fallthru
      _
    %v41 = vld [vmem:[#allocation2] sm:$0xff]
    %v42 = vld [vmem:[#allocation5] sm:$0xff]
    %v43 = vld [vmem:[#allocation5 + $0x8] sm:$0xff]
    %v44 = vld [vmem:[#allocation5 + $0x10] sm:$0xff]
    %v45 = vld [vmem:[#allocation5 + $0x18] sm:$0xff]
    %v46 = vld [vmem:[#allocation5 + $0x20] sm:$0xff]
    %v47 = vld [vmem:[#allocation5 + $0x28] sm:$0xff]
    %v48 = vld [vmem:[#allocation5 + $0x30] sm:$0xff]
    %v49 = vld [vmem:[#allocation5 + $0x38] sm:$0xff]
    %v50 = vld [vmem:[%s2] sm:$0x3]
    %v52 = vlaneseq
    %v53 = vshrl.u32 %v52, 7
    %v54 = vsub.s32 0, %v53
    %v55 = vrot.slane %v50, %v54
    %v56 = vlaneseq
    %v57 = vshrl.u32 %v56, 7
    %v58 = vsub.s32 1, %v57
    %v59 = vrot.slane %v50, %v58
    %vm62 = vcmask 261120
    %v64 = vsel %vm62, %v41, 0
    %66 = vmatprep.subr.mxu0 %v43
    %67 = vmatpush1.msra.mxu0 %v42
    %68 = vmatprep.subr.mxu0 %v45
    %69 = vmatpush1.msra.mxu0 %v44
    %70 = vmatprep.subr.mxu0 %v47
    %71 = vmatpush1.msra.mxu0 %v46
    %72 = vmatprep.subr.mxu0 %v49
    %73 = vmatpush1.msra.mxu0 %v48
    %74 = vmatprep.subr.mxu0 0.0
    %75 = vmatpush1.msra.mxu0 0.0
    %76 = vmatprep.subr.mxu0 0.0
    %77 = vmatpush1.msra.mxu0 0.0
    %78 = vmatprep.subr.mxu0 0.0
    %79 = vmatpush1.msra.mxu0 0.0
    %80 = vmatprep.subr.mxu0 0.0
    %81 = vmatpush1.msra.mxu0 0.0
    %82 = vmatprep.subr.mxu0 0.0
    %83 = vmatpush1.msra.mxu0 0.0
    %84 = vmatprep.subr.mxu0 0.0
    %85 = vmatpush1.msra.mxu0 0.0
    %86 = vmatprep.subr.mxu0 0.0
    %87 = vmatpush1.msra.mxu0 0.0
    %88 = vmatprep.subr.mxu0 0.0
    %89 = vmatpush1.msra.mxu0 0.0
    %90 = vmatprep.subr.mxu0 0.0
    %91 = vmatpush1.msra.mxu0 0.0
    %92 = vmatprep.subr.mxu0 0.0
    %93 = vmatpush1.msra.mxu0 0.0
    %94 = vmatprep.subr.mxu0 0.0
    %95 = vmatpush1.msra.mxu0 0.0
    %96 = vmatprep.subr.mxu0 0.0
    %97 = vmatpush1.msra.mxu0 0.0
    %98 = vmatprep.subr.mxu0 0.0
    %99 = vmatpush1.msra.mxu0 0.0
    %100 = vmatprep.subr.mxu0 0.0
    %101 = vmatpush1.msra.mxu0 0.0
    %102 = vmatprep.subr.mxu0 0.0
    %103 = vmatpush1.msra.mxu0 0.0
    %104 = vmatprep.subr.mxu0 0.0
    %105 = vmatpush1.msra.mxu0 0.0
    %106 = vmatprep.subr.mxu0 0.0
    %107 = vmatpush1.msra.mxu0 0.0
    %108 = vmatprep.subr.mxu0 0.0
    %109 = vmatpush1.msra.mxu0 0.0
    %110 = vmatprep.subr.mxu0 0.0
    %111 = vmatpush1.msra.mxu0 0.0
    %112 = vmatprep.subr.mxu0 0.0
    %113 = vmatpush1.msra.mxu0 0.0
    %114 = vmatprep.subr.mxu0 0.0
    %115 = vmatpush1.msra.mxu0 0.0
    %116 = vmatprep.subr.mxu0 0.0
    %117 = vmatpush1.msra.mxu0 0.0
    %118 = vmatprep.subr.mxu0 0.0
    %119 = vmatpush1.msra.mxu0 0.0
    %120 = vmatprep.subr.mxu0 0.0
    %121 = vmatpush1.msra.mxu0 0.0
    %122 = vmatprep.subr.mxu0 0.0
    %123 = vmatpush1.msra.mxu0 0.0
    %124 = vmatprep.subr.mxu0 0.0
    %125 = vmatpush1.msra.mxu0 0.0
    %126 = vmatprep.subr.mxu0 0.0
    %127 = vmatpush1.msra.mxu0 0.0
    %128 = vmatprep.subr.mxu0 0.0
    %129 = vmatpush1.msra.mxu0 0.0
    %130 = vmatprep.mubr.f32.mxu0 0.0
    %131 = vmatmul.mubr.f32.gmra.mrb[0].mxu0 %v64
    %v132 = vpop.f32.mrb[0].mxu0
    %v133 = vadd.f32 %v55, %v132
    %v134 = vpop.f32.mrb[0].mxu0
    %v135 = vadd.f32 %v59, %v134
    %136 = vdwg.mxu0
    %v137 = vtanh.pop %v133
    %v138 = vmax.f32 %v135, 0.0
    %v139 = vadd.f32 %v137, 0.1
    %v140 = vadd.f32 %v138, 0.100001
    %v141 = vrcp.pop %v140
    %v142 = vmul.f32 %v139, %v141
    %v143 = vtanh.pop %v142
    %144 = vst [vmem:[#allocation7] sm:$0xff] %v143
    // Predicated region
    $region22: #{tpu_custom_call.1} parent=1 // pred_check
      _
    $region23: #{tpu_custom_call.1} parent=1 // pred_check_branch
      %146 = sbr.rel (0) target = $region25
    $region24: #{tpu_custom_call.1} parent=1 // pred_region
      %s148 = ssub.s32 128, 128
      %149 = vsyncadd [#allocation4], %s148
      %s151 = sshll.u32 [#allocation7], 4
      %s152 = int_to_ptr.vmem [resolvable:$true] %s151
      %154 = dma.vmem_to_hbm [thread:$0]  %s152, 128, %s3, [#allocation4]
    $region25: #{tpu_custom_call.1} parent=1 // pred_fallthru
      _
    // Predicated region
    $region26: #{tpu_custom_call.1} parent=1 // pred_check
      _
    $region27: #{tpu_custom_call.1} parent=1 // pred_check_branch
      %156 = sbr.rel (0) target = $region29
    $region28: #{tpu_custom_call.1} parent=1 // pred_region
      %157 = dma.done [#allocation4], 128
    $region29: #{tpu_custom_call.1} parent=1 // pred_fallthru
      _
    %158 = vsyncpa [#allocation3], 1
    %159 = vsyncpa [#allocation6], 1
    %160 = vsyncpa [#allocation4], 1

</llo_original>
